<compile_context>
chip_gen: v7x
topology: tpu7x:2x2x1
jax: 0.10.0
libtpu: 0.0.40
codegen_flags: <defaults>
</compile_context>

<pallas_src>
import functools

import jax
import jax.numpy as jnp
from jax.experimental import pallas as pl
from jax.experimental.pallas import tpu as pltpu

HIDDEN = 32            # hidden_dim
EXTRA = 16             # extra_feature_dim
HALF = HIDDEN // 2
PACK = 4               # samples packed per 128-lane row
LANES = PACK * HIDDEN      # 128
E_LANES = PACK * EXTRA     # 64
BN_EPS = 1e-5
LN_EPS = 1e-5
MAX_TILE_B = 8192      # samples per grid step (rows = 2048; ~3.5 MiB double-buffered)


def _fusion_kernel(t4_ref, e4_ref, wt_ref, wp_ref, wfp_ref, mavg_ref, vec_ref, out_ref):
    vec = vec_ref[...]                                      # [4, 128] f32 bias/scale slab
    t4 = t4_ref[...]                                        # [R, 128] bf16 (4 samples/row)
    e4 = e4_ref[...]                                        # [R, 64]  bf16

    # Extra path: Linear (BatchNorm eval folded in) -> ReLU.
    p = jnp.maximum(
        jnp.dot(e4, wp_ref[...], preferred_element_type=jnp.float32)
        + vec[3:4, :E_LANES],
        0.0)                                                # [R, 64] f32

    # Text path (attention@seq=1 + fc + fusion Linear) + extra half of the fusion
    # Linear. LayerNorm mean-centering is folded into these weights offline, so
    # `d` is already the centered LayerNorm input.
    d = (jnp.dot(t4, wt_ref[...], preferred_element_type=jnp.float32)
         + jnp.dot(p.astype(jnp.bfloat16), wfp_ref[...],
                   preferred_element_type=jnp.float32)
         + vec[0:1, :])                                     # [R, 128] f32

    # Per-32-lane-sample variance via block-diagonal averaging matmul (f32 MXU).
    var = jnp.dot(d * d, mavg_ref[...], preferred_element_type=jnp.float32)
    g = d * jax.lax.rsqrt(var + LN_EPS) * vec[1:2, :] + vec[2:3, :]

    # Dropout is identity at inference; final ReLU. Full-width (unmasked) store.
    out_ref[...] = jnp.maximum(g, 0.0).astype(out_ref.dtype)


def init_raw_params(key):
    """Deterministic synthetic parameters matching the torch module shapes.
    Linear weights stored [in, out] (= torch weight transposed). wq/wk/bq/bk are
    mathematically dead for seq_len == 1 and are not created."""
    ks = jax.random.split(key, 12)

    def linear(k, fan_in, fan_out):
        k1, k2 = jax.random.split(k)
        bound = 1.0 / jnp.sqrt(jnp.float32(fan_in))
        w = jax.random.uniform(k1, (fan_in, fan_out), jnp.float32, -bound, bound)
        b = jax.random.uniform(k2, (1, fan_out), jnp.float32, -bound, bound)
        return w, b

    wv, bv = linear(ks[0], HIDDEN, HIDDEN)        # self_attention.wv
    wfc, bfc = linear(ks[1], HIDDEN, HIDDEN)      # self_attention.fc
    wp, bp = linear(ks[2], EXTRA, HALF)           # extra_projection[0]
    bn_g = jax.random.uniform(ks[3], (1, HALF), jnp.float32, 0.5, 1.5)
    bn_b = 0.1 * jax.random.normal(ks[4], (1, HALF), jnp.float32)
    bn_m = 0.1 * jax.random.normal(ks[5], (1, HALF), jnp.float32)
    bn_v = jax.random.uniform(ks[6], (1, HALF), jnp.float32, 0.5, 1.5)
    wf, bf = linear(ks[7], HIDDEN + HALF, HIDDEN)  # fusion_layer[0]
    ln_g = jax.random.uniform(ks[8], (1, HIDDEN), jnp.float32, 0.5, 1.5)
    ln_b = 0.1 * jax.random.normal(ks[9], (1, HIDDEN), jnp.float32)
    return dict(wv=wv, bv=bv, wfc=wfc, bfc=bfc, wp=wp, bp=bp,
                bn_g=bn_g, bn_b=bn_b, bn_m=bn_m, bn_v=bn_v,
                wf=wf, bf=bf, ln_g=ln_g, ln_b=ln_b)


def fold_params(rp):
    """Offline constant folding + block-diagonal packing (done once, outside the kernel)."""
    dot = functools.partial(jnp.dot, precision=jax.lax.Precision.HIGHEST)
    wf_a = rp["wf"][:HIDDEN, :]                    # acts on attended features
    wf_p = rp["wf"][HIDDEN:, :]                    # acts on projected extra features

    # seq_len==1 attention (softmax == 1 exactly) + fc + fusion Linear (text half).
    w_text = dot(dot(rp["wv"], rp["wfc"]), wf_a)                         # [32, 32]
    b_comb = dot(dot(rp["bv"], rp["wfc"]) + rp["bfc"], wf_a) + rp["bf"]  # [1, 32]

    # BatchNorm1d eval folded into the extra-projection Linear.
    s = rp["bn_g"] / jnp.sqrt(rp["bn_v"] + BN_EPS)                   # [1, 16]
    wp_f = rp["wp"] * s                                              # [16, 16]
    bp_f = (rp["bp"] - rp["bn_m"]) * s + rp["bn_b"]                  # [1, 16]

    # Fold the LayerNorm mean-centering (a linear map) into the upstream weights:
    # d = f @ (I - avg). The variance matmul still uses the original averaging matrix.
    avg32 = jnp.full((HIDDEN, HIDDEN), 1.0 / HIDDEN, jnp.float32)
    C = jnp.eye(HIDDEN, dtype=jnp.float32) - avg32
    w_text_c = dot(w_text, C)
    wf_p_c = dot(wf_p, C)
    b_comb_c = dot(b_comb, C)

    # Block-diagonal expansion: 4 independent samples per 128-lane row. Matmul
    # operands are bf16 (f32 accumulation in-kernel); averaging matrix stays f32.
    eye = jnp.eye(PACK, dtype=jnp.float32)
    wt_blk = jnp.kron(eye, w_text_c).astype(jnp.bfloat16)            # [128, 128]
    wp_blk = jnp.kron(eye, wp_f).astype(jnp.bfloat16)                # [64, 64]
    wfp_blk = jnp.kron(eye, wf_p_c).astype(jnp.bfloat16)             # [64, 128]
    mavg = jnp.kron(eye, avg32)                                      # [128, 128] f32

    bp_row = jnp.pad(jnp.tile(bp_f, (1, PACK)),
                     ((0, 0), (0, LANES - E_LANES)))                 # [1, 128]
    vec = jnp.concatenate([jnp.tile(b_comb_c, (1, PACK)),            # row 0: fused bias (centered)
                           jnp.tile(rp["ln_g"], (1, PACK)),          # row 1: LN gamma
                           jnp.tile(rp["ln_b"], (1, PACK)),          # row 2: LN beta
                           bp_row], axis=0)                          # row 3: extra-proj bias -> [4,128]
    return (wt_blk, wp_blk, wfp_blk, mavg, vec)


def _round_up(x, m):
    return (x + m - 1) // m * m


def text_feature_fusion(text_features, extra_features, kparams, *,
                        max_tile_b=MAX_TILE_B, out_dtype=jnp.bfloat16):
    """text_features: [B, 32], extra_features: [B, 16] -> [B, 32] (inference).

    The offline attention fold is exact only because inputs are [B, hidden]
    (seq_len == 1, as in the torch module's unsqueeze(1))."""
    assert text_features.ndim == 2 and text_features.shape[1] == HIDDEN
    assert extra_features.ndim == 2 and extra_features.shape[1] == EXTRA
    assert extra_features.shape[0] == text_features.shape[0]
    B = text_features.shape[0]

    # Choose tile_b so padding is at most one 64-sample alignment tail (bf16 tiles
    # need row counts that are multiples of 16; 64 samples = 16 packed rows).
    ALIGN = PACK * 16
    n_tiles = max(1, -(-B // max_tile_b))
    tile_b = _round_up(-(-B // n_tiles), ALIGN)
    b_pad = n_tiles * tile_b
    pad = b_pad - B

    t = text_features.astype(jnp.bfloat16)
    e = extra_features.astype(jnp.bfloat16)
    if pad:
        t = jnp.pad(t, ((0, pad), (0, 0)))
        e = jnp.pad(e, ((0, pad), (0, 0)))

    # Pack 4 samples per 128-lane row (row-major => free reshape, no data movement).
    t4 = t.reshape(b_pad // PACK, LANES)
    e4 = e.reshape(b_pad // PACK, E_LANES)
    rows = tile_b // PACK

    wt_blk, wp_blk, wfp_blk, mavg, vec = kparams

    def const(shape):  # resident weights: same block every step -> DMA'd once
        return pl.BlockSpec(shape, lambda i: (0, 0))

    out4 = pl.pallas_call(
        _fusion_kernel,
        out_shape=jax.ShapeDtypeStruct((b_pad // PACK, LANES), out_dtype),
        grid=(n_tiles,),
        in_specs=[
            pl.BlockSpec((rows, LANES), lambda i: (i, 0)),     # packed text (bf16)
            pl.BlockSpec((rows, E_LANES), lambda i: (i, 0)),   # packed extra (bf16)
            const(wt_blk.shape), const(wp_blk.shape), const(wfp_blk.shape),
            const(mavg.shape), const(vec.shape),
        ],
        out_specs=pl.BlockSpec((rows, LANES), lambda i: (i, 0)),
        # NOTE: on v7x, pltpu.CORE_PARALLEL here splits the batch grid across both
        # TensorCores (biggest v7x lever); "parallel" kept as the portable default.
        compiler_params=pltpu.CompilerParams(
            dimension_semantics=("parallel",)),
    )(t4, e4, wt_blk, wp_blk, wfp_blk, mavg, vec)

    out = out4.reshape(b_pad, HIDDEN)
    return out[:B] if pad else out


def reference_forward(rp, text, extra):
    """Pure-JAX reference of the torch forward (inference), unfolded, f32."""
    dot = functools.partial(jnp.dot, precision=jax.lax.Precision.HIGHEST)
    # MultiHeadSelfAttention with seq_len == 1: softmax over 1 key == 1 -> context == v.
    v = dot(text, rp["wv"]) + rp["bv"]
    attended = dot(v, rp["wfc"]) + rp["bfc"]
    p = dot(extra, rp["wp"]) + rp["bp"]
    p = (p - rp["bn_m"]) / jnp.sqrt(rp["bn_v"] + BN_EPS) * rp["bn_g"] + rp["bn_b"]
    p = jnp.maximum(p, 0.0)
    comb = jnp.concatenate([attended, p], axis=-1)
    f = dot(comb, rp["wf"]) + rp["bf"]
    mu = jnp.mean(f, axis=-1, keepdims=True)
    var = jnp.mean((f - mu) ** 2, axis=-1, keepdims=True)
    f = (f - mu) / jnp.sqrt(var + LN_EPS) * rp["ln_g"] + rp["ln_b"]
    return jnp.maximum(f, 0.0)


if __name__ == "__main__":
    key = jax.random.PRNGKey(0)
    kp, kt, ke = jax.random.split(key, 3)

    raw = init_raw_params(kp)
    kparams = fold_params(raw)

    batch = 2
    text = jax.random.normal(kt, (batch, HIDDEN), jnp.float32)
    extra = jax.random.normal(ke, (batch, EXTRA), jnp.float32)

    fused = jax.jit(lambda t, e: text_feature_fusion(t, e, kparams))(text, extra)
    jax.block_until_ready(fused)
    assert fused.shape == (batch, HIDDEN) and fused.dtype == jnp.bfloat16

    ref = reference_forward(raw, text, extra)
    err = float(jnp.max(jnp.abs(fused.astype(jnp.float32) - ref)))
    # Tolerance reflects bf16 input/weight/output quantization (per perf review);
    # all accumulation and LayerNorm math inside the kernel remain f32.
    assert err < 5e-2, f"max abs err vs reference: {err}"
    print("KERNEL_OK")
</pallas_src>

<mosaic_0001>
module attributes {stable_mosaic.version = 11 : i64} {
  func.func @_fusion_kernel(%arg0: i32, %arg1: memref<16x128xbf16, #tpu.memory_space<vmem>>, %arg2: memref<16x64xbf16, #tpu.memory_space<vmem>>, %arg3: memref<128x128xbf16, #tpu.memory_space<vmem>>, %arg4: memref<64x64xbf16, #tpu.memory_space<vmem>>, %arg5: memref<64x128xbf16, #tpu.memory_space<vmem>>, %arg6: memref<128x128xf32, #tpu.memory_space<vmem>>, %arg7: memref<4x128xf32, #tpu.memory_space<vmem>>, %arg8: memref<16x128xbf16, #tpu.memory_space<vmem>>) attributes {dimension_semantics = [#tpu.dimension_semantics<parallel>], iteration_bounds = array<i64: 1>, scalar_prefetch = 0 : i64, scratch_operands = 0 : i64, tpu.core_type = #tpu.core_type<tc>, window_params = [{transform_indices = @transform_0, window_bounds = array<i64: 16, 128>}, {transform_indices = @transform_1, window_bounds = array<i64: 16, 64>}, {pipeline_mode = #tpu.pipeline_mode<synchronous>, transform_indices = @transform_2, window_bounds = array<i64: 128, 128>}, {pipeline_mode = #tpu.pipeline_mode<synchronous>, transform_indices = @transform_3, window_bounds = array<i64: 64, 64>}, {pipeline_mode = #tpu.pipeline_mode<synchronous>, transform_indices = @transform_4, window_bounds = array<i64: 64, 128>}, {pipeline_mode = #tpu.pipeline_mode<synchronous>, transform_indices = @transform_5, window_bounds = array<i64: 128, 128>}, {pipeline_mode = #tpu.pipeline_mode<synchronous>, transform_indices = @transform_6, window_bounds = array<i64: 4, 128>}, {transform_indices = @transform_7, window_bounds = array<i64: 16, 128>}]} {
    %c0 = arith.constant 0 : index
    %c0_0 = arith.constant 0 : index
    %0 = vector.load %arg7[%c0, %c0_0] : memref<4x128xf32, #tpu.memory_space<vmem>>, vector<4x128xf32>
    %c0_1 = arith.constant 0 : index
    %c0_2 = arith.constant 0 : index
    %1 = vector.load %arg1[%c0_1, %c0_2] : memref<16x128xbf16, #tpu.memory_space<vmem>>, vector<16x128xbf16>
    %c0_3 = arith.constant 0 : index
    %c0_4 = arith.constant 0 : index
    %2 = vector.load %arg2[%c0_3, %c0_4] : memref<16x64xbf16, #tpu.memory_space<vmem>>, vector<16x64xbf16>
    %c0_5 = arith.constant 0 : index
    %c0_6 = arith.constant 0 : index
    %3 = vector.load %arg4[%c0_5, %c0_6] : memref<64x64xbf16, #tpu.memory_space<vmem>>, vector<64x64xbf16>
    %cst = arith.constant dense<0.000000e+00> : vector<16x64xf32>
    %4 = tpu.matmul %2, %3, %cst {dimension_numbers = #tpu.dot_dimension_numbers<[1], [0], [0], [1], [0, 0, 1, 1], [], []>} : vector<16x64xbf16>, vector<64x64xbf16>, vector<16x64xf32> -> vector<16x64xf32>
    %5 = vector.extract_strided_slice %0 {offsets = [3, 0], sizes = [1, 64], strides = [1, 1]} : vector<4x128xf32> to vector<1x64xf32>
    %6 = vector.broadcast %5 : vector<1x64xf32> to vector<16x64xf32>
    %7 = arith.addf %4, %6 : vector<16x64xf32>
    %cst_7 = arith.constant 0.000000e+00 : f32
    %8 = vector.broadcast %cst_7 : f32 to vector<16x64xf32>
    %9 = arith.maximumf %7, %8 : vector<16x64xf32>
    %c0_8 = arith.constant 0 : index
    %c0_9 = arith.constant 0 : index
    %10 = vector.load %arg3[%c0_8, %c0_9] : memref<128x128xbf16, #tpu.memory_space<vmem>>, vector<128x128xbf16>
    %cst_10 = arith.constant dense<0.000000e+00> : vector<16x128xf32>
    %11 = tpu.matmul %1, %10, %cst_10 {dimension_numbers = #tpu.dot_dimension_numbers<[1], [0], [0], [1], [0, 0, 1, 1], [], []>} : vector<16x128xbf16>, vector<128x128xbf16>, vector<16x128xf32> -> vector<16x128xf32>
    %12 = arith.truncf %9 : vector<16x64xf32> to vector<16x64xbf16>
    %c0_11 = arith.constant 0 : index
    %c0_12 = arith.constant 0 : index
    %13 = vector.load %arg5[%c0_11, %c0_12] : memref<64x128xbf16, #tpu.memory_space<vmem>>, vector<64x128xbf16>
    %cst_13 = arith.constant dense<0.000000e+00> : vector<16x128xf32>
    %14 = tpu.matmul %12, %13, %cst_13 {dimension_numbers = #tpu.dot_dimension_numbers<[1], [0], [0], [1], [0, 0, 1, 1], [], []>} : vector<16x64xbf16>, vector<64x128xbf16>, vector<16x128xf32> -> vector<16x128xf32>
    %15 = arith.addf %11, %14 : vector<16x128xf32>
    %16 = vector.extract_strided_slice %0 {offsets = [0, 0], sizes = [1, 128], strides = [1, 1]} : vector<4x128xf32> to vector<1x128xf32>
    %17 = vector.broadcast %16 : vector<1x128xf32> to vector<16x128xf32>
    %18 = arith.addf %15, %17 : vector<16x128xf32>
    %19 = arith.mulf %18, %18 : vector<16x128xf32>
    %c0_14 = arith.constant 0 : index
    %c0_15 = arith.constant 0 : index
    %20 = vector.load %arg6[%c0_14, %c0_15] : memref<128x128xf32, #tpu.memory_space<vmem>>, vector<128x128xf32>
    %cst_16 = arith.constant dense<0.000000e+00> : vector<16x128xf32>
    %21 = tpu.matmul %19, %20, %cst_16 {dimension_numbers = #tpu.dot_dimension_numbers<[1], [0], [0], [1], [0, 0, 1, 1], [], []>} : vector<16x128xf32>, vector<128x128xf32>, vector<16x128xf32> -> vector<16x128xf32>
    %cst_17 = arith.constant 9.99999974E-6 : f32
    %22 = vector.broadcast %cst_17 : f32 to vector<16x128xf32>
    %23 = arith.addf %21, %22 : vector<16x128xf32>
    %24 = math.rsqrt %23 : vector<16x128xf32>
    %25 = arith.mulf %18, %24 : vector<16x128xf32>
    %26 = vector.extract_strided_slice %0 {offsets = [1, 0], sizes = [1, 128], strides = [1, 1]} : vector<4x128xf32> to vector<1x128xf32>
    %27 = vector.broadcast %26 : vector<1x128xf32> to vector<16x128xf32>
    %28 = arith.mulf %25, %27 : vector<16x128xf32>
    %29 = vector.extract_strided_slice %0 {offsets = [2, 0], sizes = [1, 128], strides = [1, 1]} : vector<4x128xf32> to vector<1x128xf32>
    %30 = vector.broadcast %29 : vector<1x128xf32> to vector<16x128xf32>
    %31 = arith.addf %28, %30 : vector<16x128xf32>
    %cst_18 = arith.constant 0.000000e+00 : f32
    %32 = vector.broadcast %cst_18 : f32 to vector<16x128xf32>
    %33 = arith.maximumf %31, %32 : vector<16x128xf32>
    %34 = arith.truncf %33 : vector<16x128xf32> to vector<16x128xbf16>
    %c0_19 = arith.constant 0 : index
    %c0_20 = arith.constant 0 : index
    %35 = vector.load %arg8[%c0_19, %c0_20] : memref<16x128xbf16, #tpu.memory_space<vmem>>, vector<16x128xbf16>
    tpu.vector_store %arg8[%c0_19, %c0_20], %34 {strides = array<i32>} : memref<16x128xbf16, #tpu.memory_space<vmem>>, vector<16x128xbf16>,
    return
  }
  func.func @transform_0(%arg0: i32) -> (i32, i32) {
    %c0_i32 = arith.constant 0 : i32
    %c0_i32_0 = arith.constant 0 : i32
    return %arg0, %c0_i32 : i32, i32
  }
  func.func @transform_1(%arg0: i32) -> (i32, i32) {
    %c0_i32 = arith.constant 0 : i32
    %c0_i32_0 = arith.constant 0 : i32
    return %arg0, %c0_i32 : i32, i32
  }
  func.func @transform_2(%arg0: i32) -> (i32, i32) {
    %c0_i32 = arith.constant 0 : i32
    %c0_i32_0 = arith.constant 0 : i32
    %c0_i32_1 = arith.constant 0 : i32
    return %c0_i32, %c0_i32_0 : i32, i32
  }
  func.func @transform_3(%arg0: i32) -> (i32, i32) {
    %c0_i32 = arith.constant 0 : i32
    %c0_i32_0 = arith.constant 0 : i32
    %c0_i32_1 = arith.constant 0 : i32
    return %c0_i32, %c0_i32_0 : i32, i32
  }
  func.func @transform_4(%arg0: i32) -> (i32, i32) {
    %c0_i32 = arith.constant 0 : i32
    %c0_i32_0 = arith.constant 0 : i32
    %c0_i32_1 = arith.constant 0 : i32
    return %c0_i32, %c0_i32_0 : i32, i32
  }
  func.func @transform_5(%arg0: i32) -> (i32, i32) {
    %c0_i32 = arith.constant 0 : i32
    %c0_i32_0 = arith.constant 0 : i32
    %c0_i32_1 = arith.constant 0 : i32
    return %c0_i32, %c0_i32_0 : i32, i32
  }
  func.func @transform_6(%arg0: i32) -> (i32, i32) {
    %c0_i32 = arith.constant 0 : i32
    %c0_i32_0 = arith.constant 0 : i32
    %c0_i32_1 = arith.constant 0 : i32
    return %c0_i32, %c0_i32_0 : i32, i32
  }
  func.func @transform_7(%arg0: i32) -> (i32, i32) {
    %c0_i32 = arith.constant 0 : i32
    %c0_i32_0 = arith.constant 0 : i32
    return %arg0, %c0_i32 : i32, i32
  }
}

</mosaic_0001>

<llo_original>
// kernel: _lambda_.1
$region0: #{_lambda_.1}
  #allocation0 [shape = 'u32[]', space=smem, size = 0x4, offset = 0x4, fixed_abs, tag = 'smem constant byte address 0x4 - core index']
  #allocation1 [shape = 'u32[144,128]{1,0:T(1,128)}', space=vmem, size = 0x12000, scoped, tag = 'internal scratch']
  %s0 = inlined_call_operand.vmem [shape: bf16[16,128], index: 0, kind: input, shape index: {}]
  %s1 = inlined_call_operand.vmem [shape: bf16[16,64], index: 1, kind: input, shape index: {}]
  %s2 = inlined_call_operand.hbm [shape: bf16[128,128], index: 2, kind: input, shape index: {}]
  %s3 = inlined_call_operand.hbm [shape: bf16[64,64], index: 3, kind: input, shape index: {}]
  %s4 = inlined_call_operand.vmem [shape: bf16[64,128], index: 4, kind: input, shape index: {}]
  %s5 = inlined_call_operand.vmem [shape: f32[128,128], index: 5, kind: input, shape index: {}]
  %s6 = inlined_call_operand.vmem [shape: f32[4,128], index: 6, kind: input, shape index: {}]
  %s7 = inlined_call_operand.vmem [shape: bf16[16,128], index: 7, kind: output, shape index: {}]
  %s8 = sld [smem:[#allocation0]]
  $region46: #{_lambda_.1} parent=0
    _
  %s10 = ssub.s32 1, %s8
  %s11 = scalar_select 0, %s10, %s8
  $region1: #{_lambda_.1} parent=0
    #allocation2 [shape = 'u8[32768]{0}', space=vmem, size = 0x8000, scoped, tag = 'input window, operand 2, single buffered']
    #allocation3 [shape = 's32[1]{0}', space=sflag, size = 0x4, scoped, tag = 'scoped memory for _lambda_.1']
    #allocation4 [shape = 'u8[16384]{0}', space=vmem, size = 0x4000, scoped, tag = 'input window, operand 3, single buffered']
    #allocation5 [shape = 's32[1]{0}', space=sflag, size = 0x4, scoped, tag = 'scoped memory for _lambda_.1']
    %12 = vsyncpa [#allocation3], 0
    %13 = vsyncpa [#allocation5], 0
    // Predicated region
    $region2: #{_lambda_.1} parent=1 // pred_check
      _
    $region3: #{_lambda_.1} parent=1 // pred_check_branch
      %15 = sbr.rel (0) target = $region5
    $region4: #{_lambda_.1} parent=1 // pred_region
      _
    $region5: #{_lambda_.1} parent=1 // pred_fallthru
      _
    // Predicated region
    $region6: #{_lambda_.1} parent=1 // pred_check
      _
    $region7: #{_lambda_.1} parent=1 // pred_check_branch
      %17 = sbr.rel (0) target = $region9
    $region8: #{_lambda_.1} parent=1 // pred_region
      _
    $region9: #{_lambda_.1} parent=1 // pred_fallthru
      _
    // Predicated region
    $region10: #{_lambda_.1} parent=1 // pred_check
      _
    $region11: #{_lambda_.1} parent=1 // pred_check_branch
      %19 = sbr.rel (0) target = $region13
    $region12: #{_lambda_.1} parent=1 // pred_region
      %s21 = ssub.s32 1024, 1024
      %22 = vsyncadd [#allocation3], %s21
      %s23 = sshll.u32 [#allocation2], 4
      %s24 = int_to_ptr.vmem [resolvable:$true] %s23
      %29 = dma.hbm_to_vmem [thread:$0]  %s2, 1024, %s24, [#allocation3], 64, 64, 4
    $region13: #{_lambda_.1} parent=1 // pred_fallthru
      _
    // Predicated region
    $region14: #{_lambda_.1} parent=1 // pred_check
      _
    $region15: #{_lambda_.1} parent=1 // pred_check_branch
      %31 = sbr.rel (0) target = $region17
    $region16: #{_lambda_.1} parent=1 // pred_region
      %s33 = ssub.s32 512, 512
      %34 = vsyncadd [#allocation5], %s33
      %s35 = sshll.u32 [#allocation4], 4
      %s36 = int_to_ptr.vmem [resolvable:$true] %s35
      %41 = dma.hbm_to_vmem [thread:$0]  %s3, 512, %s36, [#allocation5], 64, 64, 4
    $region17: #{_lambda_.1} parent=1 // pred_fallthru
      _
    // Predicated region
    $region18: #{_lambda_.1} parent=1 // pred_check
      _
    $region19: #{_lambda_.1} parent=1 // pred_check_branch
      %43 = sbr.rel (0) target = $region21
    $region20: #{_lambda_.1} parent=1 // pred_region
      _
    $region21: #{_lambda_.1} parent=1 // pred_fallthru
      _
    // Predicated region
    $region22: #{_lambda_.1} parent=1 // pred_check
      _
    $region23: #{_lambda_.1} parent=1 // pred_check_branch
      %45 = sbr.rel (0) target = $region25
    $region24: #{_lambda_.1} parent=1 // pred_region
      _
    $region25: #{_lambda_.1} parent=1 // pred_fallthru
      _
    // Predicated region
    $region26: #{_lambda_.1} parent=1 // pred_check
      _
    $region27: #{_lambda_.1} parent=1 // pred_check_branch
      %47 = sbr.rel (0) target = $region29
    $region28: #{_lambda_.1} parent=1 // pred_region
      _
    $region29: #{_lambda_.1} parent=1 // pred_fallthru
      _
    // Predicated region
    $region30: #{_lambda_.1} parent=1 // pred_check
      _
    $region31: #{_lambda_.1} parent=1 // pred_check_branch
      %49 = sbr.rel (0) target = $region33
    $region32: #{_lambda_.1} parent=1 // pred_region
      %50 = dma.done [#allocation3], 1024
    $region33: #{_lambda_.1} parent=1 // pred_fallthru
      _
    // Predicated region
    $region34: #{_lambda_.1} parent=1 // pred_check
      _
    $region35: #{_lambda_.1} parent=1 // pred_check_branch
      %52 = sbr.rel (0) target = $region37
    $region36: #{_lambda_.1} parent=1 // pred_region
      %53 = dma.done [#allocation5], 512
    $region37: #{_lambda_.1} parent=1 // pred_fallthru
      _
    %v55 = vld [vmem:[%s6] sm:$0xf]
    %v56 = vld [vmem:[%s0] sm:$0xf]
    %v57 = vld [vmem:[%s0 + $0x4] sm:$0xf]
    %v58 = vld [vmem:[%s1] sm:$0xf]
    %v59 = vld [vmem:[%s1 + $0x4] sm:$0xf]
    %v60 = vld [vmem:[#allocation4] sm:$0xf]
    %v61 = vld [vmem:[#allocation4 + $0x4] sm:$0xf]
    %v62 = vld [vmem:[#allocation4 + $0x8] sm:$0xf]
    %v63 = vld [vmem:[#allocation4 + $0xc] sm:$0xf]
    %v64 = vld [vmem:[#allocation4 + $0x10] sm:$0xf]
    %v65 = vld [vmem:[#allocation4 + $0x14] sm:$0xf]
    %v66 = vld [vmem:[#allocation4 + $0x18] sm:$0xf]
    %v67 = vld [vmem:[#allocation4 + $0x1c] sm:$0xf]
    %v68 = vlaneseq
    %v69 = vshrl.u32 %v68, 7
    %v70 = vsub.s32 3, %v69
    %v71 = vrot.slane %v55, %v70
    %v74 = vunpack.c.l.b16 %v58
    %v75 = vunpack.c.l.b16 %v59
    %v76 = vpack.c.b16 %v75, %v74
    %v85 = vunpack.c.l.b16 %v60
    %v86 = vunpack.c.l.b16 %v61
    %v87 = vunpack.c.l.b16 %v62
    %v88 = vunpack.c.l.b16 %v63
    %v89 = vunpack.c.l.b16 %v64
    %v90 = vunpack.c.l.b16 %v65
    %v91 = vunpack.c.l.b16 %v66
    %v92 = vunpack.c.l.b16 %v67
    %v93 = vpack.c.b16 %v86, %v85
    %v94 = vpack.c.b16 %v88, %v87
    %v95 = vpack.c.b16 %v90, %v89
    %v96 = vpack.c.b16 %v92, %v91
    %vm101 = vcmask 523264
    %v103 = vsel %vm101, %v76, 0
    %105 = vmatprep.subr.bf16.mxu0 0
    %106 = vmatpush1.bf16.msra.mxu0 %v93
    %107 = vmatprep.subr.bf16.mxu0 0
    %108 = vmatpush1.bf16.msra.mxu0 %v94
    %109 = vmatprep.subr.bf16.mxu0 0
    %110 = vmatpush1.bf16.msra.mxu0 %v95
    %111 = vmatprep.subr.bf16.mxu0 0
    %112 = vmatpush1.bf16.msra.mxu0 %v96
    %113 = vmatprep.subr.bf16.mxu0 0
    %114 = vmatpush1.bf16.msra.mxu0 0
    %115 = vmatprep.subr.bf16.mxu0 0
    %116 = vmatpush1.bf16.msra.mxu0 0
    %117 = vmatprep.subr.bf16.mxu0 0
    %118 = vmatpush1.bf16.msra.mxu0 0
    %119 = vmatprep.subr.bf16.mxu0 0
    %120 = vmatpush1.bf16.msra.mxu0 0
    %121 = vmatprep.subr.bf16.mxu0 0
    %122 = vmatpush1.bf16.msra.mxu0 0
    %123 = vmatprep.subr.bf16.mxu0 0
    %124 = vmatpush1.bf16.msra.mxu0 0
    %125 = vmatprep.subr.bf16.mxu0 0
    %126 = vmatpush1.bf16.msra.mxu0 0
    %127 = vmatprep.subr.bf16.mxu0 0
    %128 = vmatpush1.bf16.msra.mxu0 0
    %129 = vmatprep.subr.bf16.mxu0 0
    %130 = vmatpush1.bf16.msra.mxu0 0
    %131 = vmatprep.subr.bf16.mxu0 0
    %132 = vmatpush1.bf16.msra.mxu0 0
    %133 = vmatprep.subr.bf16.mxu0 0
    %134 = vmatpush1.bf16.msra.mxu0 0
    %135 = vmatprep.subr.bf16.mxu0 0
    %136 = vmatpush1.bf16.msra.mxu0 0
    %137 = vmatprep.mubr.bf16.mxu0 0
    %138 = vmatmul.mubr.bf16.gmra.mrb[0].mxu0 %v103
    %v139 = vpop.f32.mrb[0].mxu0
    %v140 = vadd.f32 %v71, %v139
    %v141 = vpop.f32.mrb[0].mxu0
    %v142 = vpop.f32.mrb[0].mxu0
    %v143 = vadd.f32 %v71, %v142
    %v144 = vpop.f32.mrb[0].mxu0
    %145 = vdwg.mxu0
    %v146 = vmax.f32 %v140, 0.0
    %v147 = vmax.f32 %v143, 0.0
    %v148 = vld [vmem:[#allocation2] sm:$0xf]
    %v149 = vld [vmem:[#allocation2 + $0x4] sm:$0xf]
    %v150 = vld [vmem:[#allocation2 + $0x8] sm:$0xf]
    %v151 = vld [vmem:[#allocation2 + $0xc] sm:$0xf]
    %v152 = vld [vmem:[#allocation2 + $0x10] sm:$0xf]
    %v153 = vld [vmem:[#allocation2 + $0x14] sm:$0xf]
    %v154 = vld [vmem:[#allocation2 + $0x18] sm:$0xf]
    %v155 = vld [vmem:[#allocation2 + $0x1c] sm:$0xf]
    %v156 = vld [vmem:[#allocation2 + $0x20] sm:$0xf]
    %v157 = vld [vmem:[#allocation2 + $0x24] sm:$0xf]
    %v158 = vld [vmem:[#allocation2 + $0x28] sm:$0xf]
    %v159 = vld [vmem:[#allocation2 + $0x2c] sm:$0xf]
    %v160 = vld [vmem:[#allocation2 + $0x30] sm:$0xf]
    %v161 = vld [vmem:[#allocation2 + $0x34] sm:$0xf]
    %v162 = vld [vmem:[#allocation2 + $0x38] sm:$0xf]
    %v163 = vld [vmem:[#allocation2 + $0x3c] sm:$0xf]
    %v164 = vpack.c.bf16 %v147, %v146
    %v165 = vld [vmem:[%s4] sm:$0xf]
    %v166 = vld [vmem:[%s4 + $0x4] sm:$0xf]
    %v167 = vld [vmem:[%s4 + $0x8] sm:$0xf]
    %v168 = vld [vmem:[%s4 + $0xc] sm:$0xf]
    %v169 = vld [vmem:[%s4 + $0x10] sm:$0xf]
    %v170 = vld [vmem:[%s4 + $0x14] sm:$0xf]
    %v171 = vld [vmem:[%s4 + $0x18] sm:$0xf]
    %v172 = vld [vmem:[%s4 + $0x1c] sm:$0xf]
    %v181 = vunpack.c.l.b16 %v165
    %v182 = vunpack.c.l.b16 %v166
    %v183 = vunpack.c.l.b16 %v167
    %v184 = vunpack.c.l.b16 %v168
    %v185 = vunpack.c.l.b16 %v169
    %v186 = vunpack.c.l.b16 %v170
    %v187 = vunpack.c.l.b16 %v171
    %v188 = vunpack.c.l.b16 %v172
    %v189 = vpack.c.b16 %v182, %v181
    %v190 = vpack.c.b16 %v184, %v183
    %v191 = vpack.c.b16 %v186, %v185
    %v192 = vpack.c.b16 %v188, %v187
    %v198 = vsel %vm101, %v164, 0
    %200 = vmatprep.subr.bf16.mxu0 0
    %201 = vmatpush1.bf16.msra.mxu0 %v189
    %202 = vmatprep.subr.bf16.mxu0 0
    %203 = vmatpush1.bf16.msra.mxu0 %v190
    %204 = vmatprep.subr.bf16.mxu0 0
    %205 = vmatpush1.bf16.msra.mxu0 %v191
    %206 = vmatprep.subr.bf16.mxu0 0
    %207 = vmatpush1.bf16.msra.mxu0 %v192
    %208 = vmatprep.subr.bf16.mxu0 0
    %209 = vmatpush1.bf16.msra.mxu0 0
    %210 = vmatprep.subr.bf16.mxu0 0
    %211 = vmatpush1.bf16.msra.mxu0 0
    %212 = vmatprep.subr.bf16.mxu0 0
    %213 = vmatpush1.bf16.msra.mxu0 0
    %214 = vmatprep.subr.bf16.mxu0 0
    %215 = vmatpush1.bf16.msra.mxu0 0
    %216 = vmatprep.subr.bf16.mxu0 0
    %217 = vmatpush1.bf16.msra.mxu0 0
    %218 = vmatprep.subr.bf16.mxu0 0
    %219 = vmatpush1.bf16.msra.mxu0 0
    %220 = vmatprep.subr.bf16.mxu0 0
    %221 = vmatpush1.bf16.msra.mxu0 0
    %222 = vmatprep.subr.bf16.mxu0 0
    %223 = vmatpush1.bf16.msra.mxu0 0
    %224 = vmatprep.subr.bf16.mxu0 0
    %225 = vmatpush1.bf16.msra.mxu0 0
    %226 = vmatprep.subr.bf16.mxu0 0
    %227 = vmatpush1.bf16.msra.mxu0 0
    %228 = vmatprep.subr.bf16.mxu0 0
    %229 = vmatpush1.bf16.msra.mxu0 0
    %230 = vmatprep.subr.bf16.mxu0 0
    %231 = vmatpush1.bf16.msra.mxu0 0
    %232 = vmatprep.mubr.bf16.mxu0 0
    %233 = vmatmul.mubr.bf16.gmra.mrb[0].mxu0 %v198
    %v234 = vpop.f32.mrb[0].mxu0
    %v235 = vadd.f32 0.0, %v234
    %v236 = vpop.f32.mrb[0].mxu0
    %v237 = vpop.f32.mrb[0].mxu0
    %v238 = vadd.f32 0.0, %v237
    %v239 = vpop.f32.mrb[0].mxu0
    %240 = vdwg.mxu0
    %v243 = vunpack.c.l.b16 %v56
    %v244 = vunpack.c.l.b16 %v57
    %v245 = vpack.c.b16 %v244, %v243
    %v263 = vunpack.c.l.b16 %v148
    %v264 = vunpack.c.l.b16 %v149
    %v265 = vunpack.c.l.b16 %v150
    %v266 = vunpack.c.l.b16 %v151
    %v267 = vunpack.c.l.b16 %v152
    %v268 = vunpack.c.l.b16 %v153
    %v269 = vunpack.c.l.b16 %v154
    %v270 = vunpack.c.l.b16 %v155
    %v271 = vunpack.c.l.b16 %v156
    %v272 = vunpack.c.l.b16 %v157
    %v273 = vunpack.c.l.b16 %v158
    %v274 = vunpack.c.l.b16 %v159
    %v275 = vunpack.c.l.b16 %v160
    %v276 = vunpack.c.l.b16 %v161
    %v277 = vunpack.c.l.b16 %v162
    %v278 = vunpack.c.l.b16 %v163
    %v279 = vpack.c.b16 %v264, %v263
    %v280 = vpack.c.b16 %v266, %v265
    %v281 = vpack.c.b16 %v268, %v267
    %v282 = vpack.c.b16 %v270, %v269
    %v283 = vpack.c.b16 %v272, %v271
    %v284 = vpack.c.b16 %v274, %v273
    %v285 = vpack.c.b16 %v276, %v275
    %v286 = vpack.c.b16 %v278, %v277
    %295 = vmatprep.subr.bf16.mxu0 0
    %296 = vmatpush1.bf16.msra.mxu0 %v279
    %297 = vmatprep.subr.bf16.mxu0 0
    %298 = vmatpush1.bf16.msra.mxu0 %v280
    %299 = vmatprep.subr.bf16.mxu0 0
    %300 = vmatpush1.bf16.msra.mxu0 %v281
    %301 = vmatprep.subr.bf16.mxu0 0
    %302 = vmatpush1.bf16.msra.mxu0 %v282
    %303 = vmatprep.subr.bf16.mxu0 0
    %304 = vmatpush1.bf16.msra.mxu0 %v283
    %305 = vmatprep.subr.bf16.mxu0 0
    %306 = vmatpush1.bf16.msra.mxu0 %v284
    %307 = vmatprep.subr.bf16.mxu0 0
    %308 = vmatpush1.bf16.msra.mxu0 %v285
    %309 = vmatprep.subr.bf16.mxu0 0
    %310 = vmatpush1.bf16.msra.mxu0 %v286
    %311 = vmatprep.subr.bf16.mxu0 0
    %312 = vmatpush1.bf16.msra.mxu0 0
    %313 = vmatprep.subr.bf16.mxu0 0
    %314 = vmatpush1.bf16.msra.mxu0 0
    %315 = vmatprep.subr.bf16.mxu0 0
    %316 = vmatpush1.bf16.msra.mxu0 0
    %317 = vmatprep.subr.bf16.mxu0 0
    %318 = vmatpush1.bf16.msra.mxu0 0
    %319 = vmatprep.subr.bf16.mxu0 0
    %320 = vmatpush1.bf16.msra.mxu0 0
    %321 = vmatprep.subr.bf16.mxu0 0
    %322 = vmatpush1.bf16.msra.mxu0 0
    %323 = vmatprep.subr.bf16.mxu0 0
    %324 = vmatpush1.bf16.msra.mxu0 0
    %325 = vmatprep.subr.bf16.mxu0 0
    %326 = vmatpush1.bf16.msra.mxu0 0
    %327 = vmatprep.mubr.bf16.mxu0 0
    %328 = vmatmul.mubr.bf16.gmra.mrb[0].mxu0 %v245
    %v329 = vpop.f32.mrb[0].mxu0
    %v330 = vadd.f32 %v235, %v329
    %v331 = vpop.f32.mrb[0].mxu0
    %v332 = vpop.f32.mrb[0].mxu0
    %v333 = vadd.f32 %v238, %v332
    %v334 = vpop.f32.mrb[0].mxu0
    %335 = vdwg.mxu0
    %v336 = vlaneseq
    %v337 = vshrl.u32 %v336, 7
    %v338 = vsub.s32 0, %v337
    %v339 = vrot.slane %v55, %v338
    %v340 = vadd.f32 %v330, %v339
    %v341 = vadd.f32 %v333, %v339
    %v342 = vmul.f32 %v340, %v340
    %v343 = vmul.f32 %v341, %v341
    %v344 = vld [vmem:[%s5] sm:$0xff]
    %v345 = vld [vmem:[%s5 + $0x8] sm:$0xff]
    %v346 = vld [vmem:[%s5 + $0x10] sm:$0xff]
    %v347 = vld [vmem:[%s5 + $0x18] sm:$0xff]
    %v348 = vld [vmem:[%s5 + $0x20] sm:$0xff]
    %v349 = vld [vmem:[%s5 + $0x28] sm:$0xff]
    %v350 = vld [vmem:[%s5 + $0x30] sm:$0xff]
    %v351 = vld [vmem:[%s5 + $0x38] sm:$0xff]
    %v352 = vld [vmem:[%s5 + $0x40] sm:$0xff]
    %v353 = vld [vmem:[%s5 + $0x48] sm:$0xff]
    %v354 = vld [vmem:[%s5 + $0x50] sm:$0xff]
    %v355 = vld [vmem:[%s5 + $0x58] sm:$0xff]
    %v356 = vld [vmem:[%s5 + $0x60] sm:$0xff]
    %v357 = vld [vmem:[%s5 + $0x68] sm:$0xff]
    %v358 = vld [vmem:[%s5 + $0x70] sm:$0xff]
    %v359 = vld [vmem:[%s5 + $0x78] sm:$0xff]
    %360 = vmatprep.subr.mxu0 0.0
    %361 = vmatpush1.msra.mxu0 %v344
    %362 = vmatprep.subr.mxu0 0.0
    %363 = vmatpush1.msra.mxu0 %v345
    %364 = vmatprep.subr.mxu0 0.0
    %365 = vmatpush1.msra.mxu0 %v346
    %366 = vmatprep.subr.mxu0 0.0
    %367 = vmatpush1.msra.mxu0 %v347
    %368 = vmatprep.subr.mxu0 0.0
    %369 = vmatpush1.msra.mxu0 %v348
    %370 = vmatprep.subr.mxu0 0.0
    %371 = vmatpush1.msra.mxu0 %v349
    %372 = vmatprep.subr.mxu0 0.0
    %373 = vmatpush1.msra.mxu0 %v350
    %374 = vmatprep.subr.mxu0 0.0
    %375 = vmatpush1.msra.mxu0 %v351
    %376 = vmatprep.subr.mxu0 0.0
    %377 = vmatpush1.msra.mxu0 %v352
    %378 = vmatprep.subr.mxu0 0.0
    %379 = vmatpush1.msra.mxu0 %v353
    %380 = vmatprep.subr.mxu0 0.0
    %381 = vmatpush1.msra.mxu0 %v354
    %382 = vmatprep.subr.mxu0 0.0
    %383 = vmatpush1.msra.mxu0 %v355
    %384 = vmatprep.subr.mxu0 0.0
    %385 = vmatpush1.msra.mxu0 %v356
    %386 = vmatprep.subr.mxu0 0.0
    %387 = vmatpush1.msra.mxu0 %v357
    %388 = vmatprep.subr.mxu0 0.0
    %389 = vmatpush1.msra.mxu0 %v358
    %390 = vmatprep.subr.mxu0 0.0
    %391 = vmatpush1.msra.mxu0 %v359
    %392 = vmatprep.subr.mxu0 0.0
    %393 = vmatpush1.msra.mxu0 0.0
    %394 = vmatprep.subr.mxu0 0.0
    %395 = vmatpush1.msra.mxu0 0.0
    %396 = vmatprep.subr.mxu0 0.0
    %397 = vmatpush1.msra.mxu0 0.0
    %398 = vmatprep.subr.mxu0 0.0
    %399 = vmatpush1.msra.mxu0 0.0
    %400 = vmatprep.subr.mxu0 0.0
    %401 = vmatpush1.msra.mxu0 0.0
    %402 = vmatprep.subr.mxu0 0.0
    %403 = vmatpush1.msra.mxu0 0.0
    %404 = vmatprep.subr.mxu0 0.0
    %405 = vmatpush1.msra.mxu0 0.0
    %406 = vmatprep.subr.mxu0 0.0
    %407 = vmatpush1.msra.mxu0 0.0
    %408 = vmatprep.subr.mxu0 0.0
    %409 = vmatpush1.msra.mxu0 0.0
    %410 = vmatprep.subr.mxu0 0.0
    %411 = vmatpush1.msra.mxu0 0.0
    %412 = vmatprep.subr.mxu0 0.0
    %413 = vmatpush1.msra.mxu0 0.0
    %414 = vmatprep.subr.mxu0 0.0
    %415 = vmatpush1.msra.mxu0 0.0
    %416 = vmatprep.subr.mxu0 0.0
    %417 = vmatpush1.msra.mxu0 0.0
    %418 = vmatprep.subr.mxu0 0.0
    %419 = vmatpush1.msra.mxu0 0.0
    %420 = vmatprep.subr.mxu0 0.0
    %421 = vmatpush1.msra.mxu0 0.0
    %422 = vmatprep.subr.mxu0 0.0
    %423 = vmatpush1.msra.mxu0 0.0
    %424 = vmatprep.mubr.f32.mxu0 0.0
    %425 = vmatmul.mubr.f32.gmra.mrb[0].mxu0 %v342
    %v426 = vpop.f32.mrb[0].mxu0
    %v427 = vadd.f32 1e-05, %v426
    %v428 = vpop.f32.mrb[0].mxu0
    %429 = vmatprep.mubr.f32.mxu0 0.0
    %430 = vmatmul.mubr.f32.gmra.mrb[0].mxu0 %v343
    %v431 = vpop.f32.mrb[0].mxu0
    %v432 = vadd.f32 1e-05, %v431
    %v433 = vpop.f32.mrb[0].mxu0
    %434 = vdwg.mxu0
    %v435 = vrsqrt.pop %v427
    %v436 = vrsqrt.pop %v432
    %v437 = vmul.f32 %v340, %v435
    %v438 = vmul.f32 %v341, %v436
    %v439 = vlaneseq
    %v440 = vshrl.u32 %v439, 7
    %v441 = vsub.s32 1, %v440
    %v442 = vrot.slane %v55, %v441
    %v443 = vmul.f32 %v437, %v442
    %v444 = vmul.f32 %v438, %v442
    %v445 = vlaneseq
    %v446 = vshrl.u32 %v445, 7
    %v447 = vsub.s32 2, %v446
    %v448 = vrot.slane %v55, %v447
    %v449 = vadd.f32 %v443, %v448
    %v450 = vadd.f32 %v444, %v448
    %v451 = vmax.f32 %v449, 0.0
    %v452 = vmax.f32 %v450, 0.0
    %v453 = vpack.c.bf16 %v452, %v451
    %v455 = vunpack.c.l.b16 %v453
    %v456 = vunpack.c.h.b16 %v453
    %v457 = vpack.c.b16 %v455, %v455
    %v458 = vpack.c.b16 %v456, %v456
    %461 = vst [vmem:[%s7] sm:$0xf] %v457
    %462 = vst [vmem:[%s7 + $0x4] sm:$0xf] %v458
    // Predicated region
    $region38: #{_lambda_.1} parent=1 // pred_check
      _
    $region39: #{_lambda_.1} parent=1 // pred_check_branch
      %464 = sbr.rel (0) target = $region41
    $region40: #{_lambda_.1} parent=1 // pred_region
      _
    $region41: #{_lambda_.1} parent=1 // pred_fallthru
      _
    // Predicated region
    $region42: #{_lambda_.1} parent=1 // pred_check
      _
    $region43: #{_lambda_.1} parent=1 // pred_check_branch
      %466 = sbr.rel (0) target = $region45
    $region44: #{_lambda_.1} parent=1 // pred_region
      _
    $region45: #{_lambda_.1} parent=1 // pred_fallthru
      _
    %467 = vsyncpa [#allocation3], 1
    %468 = vsyncpa [#allocation5], 1

</llo_original>
